<compile_context>
chip_gen: v5e
topology: v5e:2x2
jax: 0.10.0
libtpu: 0.0.40
codegen_flags: <defaults>
</compile_context>

<pallas_src>
import functools

import jax
import jax.numpy as jnp
from jax.experimental import pallas as pl
from jax.experimental.pallas import tpu as pltpu


_CHUNK_ROWS = 8     # planes (sublane rows) processed per inner-loop step
_LANES = 128


def _ceil_div(a, b):
    return -(-a // b)


def _budgets():
    """(target_block_bytes, vmem_limit_bytes) per TPU generation."""
    try:
        vmem = pltpu.get_tpu_info().vmem_capacity_bytes
    except Exception:
        vmem = 128 * 1024 * 1024
    if vmem <= 64 * 1024 * 1024:            # v7x-class core: 64 MiB VMEM
        return 6 * 1024 * 1024, 44 * 1024 * 1024
    return 12 * 1024 * 1024, 64 * 1024 * 1024  # v5e / v6e: 128 MiB VMEM


def _pick_block_planes(p, plane_bytes, target_bytes):
    """Planes per grid block: multiple of 8, ~target_bytes, >=2 blocks if p>8."""
    tb = 8 * max(1, target_bytes // (8 * plane_bytes))
    tb = min(tb, 8 * _ceil_div(p, 8))                       # don't over-pad
    if p > 8:
        tb = min(tb, 8 * _ceil_div(_ceil_div(p, 2), 8))     # >=2 real blocks (v7x 2 TCs)
    return max(int(tb), 8)


def _tv_block_kernel(mask_ref, x_ref, out_ref, *, width, length, n_chunks, unroll):
    """mask_ref: (1, Lp) f32 seam mask.  x_ref: (TB, Lp) flattened planes.
    out_ref: (1, 8, 128) per-block partials (h_tv in lane 0, w_tv in lane 1)."""
    out_ref[...] = jnp.zeros_like(out_ref)
    lane = jax.lax.broadcasted_iota(jnp.int32, (8, _LANES), 1)
    seam = mask_ref[0:1, 0:length - 1]                       # (1, L-1)

    def chunk_body(ci, carry):
        r0 = pl.multiple_of(ci * _CHUNK_ROWS, _CHUNK_ROWS)
        xb = x_ref[pl.ds(r0, _CHUNK_ROWS), :].astype(jnp.float32)   # (8, Lp)
        # H-direction: x[h+1, w] - x[h, w]  ==  flat[i+W] - flat[i], i < (H-1)*W
        dh = xb[:, width:length] - xb[:, 0:length - width]          # (8, (H-1)*W)
        # W-direction: x[h, w+1] - x[h, w]  ==  flat[i+1] - flat[i], seams masked
        dw = (xb[:, 1:length] - xb[:, 0:length - 1]) * seam         # (8, L-1)
        h_s = jnp.sum(dh * dh)
        w_s = jnp.sum(dw * dw)
        out_ref[0] += (jnp.where(lane == 0, h_s, 0.0)
                       + jnp.where(lane == 1, w_s, 0.0))
        return carry

    jax.lax.fori_loop(0, n_chunks, chunk_body, 0, unroll=unroll)


def tv_loss(x, tvloss_weight: float = 1.0):
    """x: (N, C, H, W). Returns scalar TV loss matching the PyTorch module."""
    n, c, h, w = x.shape
    p = n * c
    l = h * w
    lp = _ceil_div(l, _LANES) * _LANES

    target_bytes, vmem_limit = _budgets()
    plane_bytes = lp * x.dtype.itemsize
    tb = _pick_block_planes(p, plane_bytes, target_bytes)
    padded_p = tb * _ceil_div(p, tb)
    num_blocks = padded_p // tb
    n_chunks = tb // _CHUNK_ROWS
    unroll = bool(n_chunks <= 8)

    x_flat = x.reshape(p, l)
    if padded_p != p or lp != l:
        # Zero planes / zero lane-padding contribute exactly 0 to both sums.
        x_flat = jnp.pad(x_flat, ((0, padded_p - p), (0, lp - l)))

    lane_idx = jnp.arange(lp, dtype=jnp.int32)
    seam_mask = ((lane_idx % w) != (w - 1)).astype(jnp.float32)[None, :]   # (1, lp)

    kernel = functools.partial(
        _tv_block_kernel, width=w, length=l, n_chunks=n_chunks, unroll=unroll)

    partials = pl.pallas_call(
        kernel,
        out_shape=jax.ShapeDtypeStruct((num_blocks, 8, _LANES), jnp.float32),
        grid_spec=pltpu.PrefetchScalarGridSpec(
            num_scalar_prefetch=0,
            grid=(num_blocks,),
            in_specs=[
                pl.BlockSpec((1, lp), lambda i: (0, 0)),    # seam mask (revisited)
                pl.BlockSpec((tb, lp), lambda i: (i, 0)),   # block of flattened planes
            ],
            out_specs=pl.BlockSpec((1, 8, _LANES), lambda i: (i, 0, 0)),
        ),
        compiler_params=pltpu.CompilerParams(
            dimension_semantics=("parallel",),
            vmem_limit_bytes=vmem_limit,
        ),
    )(seam_mask, x_flat)

    # Tiny cross-block reduction + PyTorch-style normalization in plain JAX.
    h_tv = jnp.sum(partials[:, 0, 0])
    w_tv = jnp.sum(partials[:, 0, 1])

    count_h = c * (h - 1) * w
    count_w = c * h * (w - 1)
    return (jnp.float32(tvloss_weight) * 2.0
            * (h_tv / count_h + w_tv / count_w) / n)


def tv_loss_ref(x, tvloss_weight: float = 1.0):
    """Pure-JAX reference (mirrors the PyTorch forward)."""
    n, c, h, w = x.shape
    count_h = c * (h - 1) * w
    count_w = c * h * (w - 1)
    h_tv = jnp.sum((x[:, :, 1:, :] - x[:, :, : h - 1, :]) ** 2)
    w_tv = jnp.sum((x[:, :, :, 1:] - x[:, :, :, : w - 1]) ** 2)
    return tvloss_weight * 2.0 * (h_tv / count_h + w_tv / count_w) / n


if __name__ == "__main__":
    key = jax.random.PRNGKey(0)
    # Small NCHW input consistent with the module's forward.
    x = jax.random.normal(key, (2, 4, 16, 16), dtype=jnp.float32)

    out = tv_loss(x, tvloss_weight=1.0)
    out = jax.block_until_ready(out)

    ref = tv_loss_ref(x, tvloss_weight=1.0)
    assert jnp.allclose(out, ref, rtol=1e-5, atol=1e-5), (out, ref)

    print("KERNEL_OK")
</pallas_src>

<mosaic_0001>
module attributes {stable_mosaic.version = 11 : i64} {
  func.func @_tv_block_kernel(%arg0: i32, %arg1: memref<1x256xf32, #tpu.memory_space<vmem>>, %arg2: memref<8x256xf32, #tpu.memory_space<vmem>>, %arg3: memref<1x8x128xf32, #tpu.memory_space<vmem>>) attributes {dimension_semantics = [#tpu.dimension_semantics<parallel>], iteration_bounds = array<i64: 1>, scalar_prefetch = 0 : i64, scratch_operands = 0 : i64, tpu.core_type = #tpu.core_type<tc>, window_params = [{pipeline_mode = #tpu.pipeline_mode<synchronous>, transform_indices = @transform_0, window_bounds = array<i64: 1, 256>}, {transform_indices = @transform_1, window_bounds = array<i64: 8, 256>}, {transform_indices = @transform_2, window_bounds = array<i64: 1, 8, 128>}]} {
    %cst = arith.constant 0.000000e+00 : f32
    %0 = vector.broadcast %cst : f32 to vector<1x8x128xf32>
    %c0 = arith.constant 0 : index
    %c0_0 = arith.constant 0 : index
    %c0_1 = arith.constant 0 : index
    %1 = vector.load %arg3[%c0, %c0_0, %c0_1] : memref<1x8x128xf32, #tpu.memory_space<vmem>>, vector<1x8x128xf32>
    tpu.vector_store %arg3[%c0, %c0_0, %c0_1], %0 {strides = array<i32>} : memref<1x8x128xf32, #tpu.memory_space<vmem>>, vector<1x8x128xf32>,
    %2 = tpu.iota {dimensions = array<i32: 1>} : vector<8x128xi32>
    %c0_2 = arith.constant 0 : index
    %c0_3 = arith.constant 0 : index
    %3 = vector.load %arg1[%c0_2, %c0_3] : memref<1x256xf32, #tpu.memory_space<vmem>>, vector<1x255xf32>
    %c0_i32 = arith.constant 0 : i32
    %c8_i32 = arith.constant 8 : i32
    %4 = arith.muli %c0_i32, %c8_i32 : i32
    %5 = tpu.assume_multiple %4, 8 : i32
    %6 = arith.index_cast %5 : i32 to index
    %c0_4 = arith.constant 0 : index
    %7 = vector.load %arg2[%6, %c0_4] : memref<8x256xf32, #tpu.memory_space<vmem>>, vector<8x256xf32>
    %8 = vector.extract_strided_slice %7 {offsets = [0, 16], sizes = [8, 240], strides = [1, 1]} : vector<8x256xf32> to vector<8x240xf32>
    %9 = vector.extract_strided_slice %7 {offsets = [0, 0], sizes = [8, 240], strides = [1, 1]} : vector<8x256xf32> to vector<8x240xf32>
    %10 = arith.subf %8, %9 : vector<8x240xf32>
    %11 = vector.extract_strided_slice %7 {offsets = [0, 1], sizes = [8, 255], strides = [1, 1]} : vector<8x256xf32> to vector<8x255xf32>
    %12 = vector.extract_strided_slice %7 {offsets = [0, 0], sizes = [8, 255], strides = [1, 1]} : vector<8x256xf32> to vector<8x255xf32>
    %13 = arith.subf %11, %12 : vector<8x255xf32>
    %14 = vector.broadcast %3 : vector<1x255xf32> to vector<8x255xf32>
    %15 = arith.mulf %13, %14 : vector<8x255xf32>
    %16 = arith.mulf %10, %10 : vector<8x240xf32>
    %17 = vector.shape_cast %16 : vector<8x240xf32> to vector<1x8x240xf32>
    %cst_5 = arith.constant dense<0.000000e+00> : vector<1xf32>
    %18 = vector.multi_reduction <add>, %17, %cst_5 [1, 2] : vector<1x8x240xf32> to vector<1xf32>
    %19 = vector.shape_cast %18 : vector<1xf32> to vector<1x1x1xf32>
    %20 = vector.extract %19[0, 0, 0] : f32 from vector<1x1x1xf32>
    %21 = arith.mulf %15, %15 : vector<8x255xf32>
    %22 = vector.shape_cast %21 : vector<8x255xf32> to vector<1x8x255xf32>
    %cst_6 = arith.constant dense<0.000000e+00> : vector<1xf32>
    %23 = vector.multi_reduction <add>, %22, %cst_6 [1, 2] : vector<1x8x255xf32> to vector<1xf32>
    %24 = vector.shape_cast %23 : vector<1xf32> to vector<1x1x1xf32>
    %25 = vector.extract %24[0, 0, 0] : f32 from vector<1x1x1xf32>
    %c0_7 = arith.constant 0 : index
    %c0_8 = arith.constant 0 : index
    %c0_9 = arith.constant 0 : index
    %26 = vector.load %arg3[%c0_7, %c0_8, %c0_9] : memref<1x8x128xf32, #tpu.memory_space<vmem>>, vector<1x8x128xf32>
    %27 = vector.shape_cast %26 : vector<1x8x128xf32> to vector<8x128xf32>
    %c0_i32_10 = arith.constant 0 : i32
    %28 = vector.broadcast %c0_i32_10 : i32 to vector<8x128xi32>
    %29 = arith.cmpi eq, %2, %28 : vector<8x128xi32>
    %cst_11 = arith.constant 0.000000e+00 : f32
    %30 = vector.broadcast %20 : f32 to vector<8x128xf32>
    %31 = vector.broadcast %cst_11 : f32 to vector<8x128xf32>
    %32 = arith.select %29, %30, %31 : vector<8x128xi1>, vector<8x128xf32>
    %c1_i32 = arith.constant 1 : i32
    %33 = vector.broadcast %c1_i32 : i32 to vector<8x128xi32>
    %34 = arith.cmpi eq, %2, %33 : vector<8x128xi32>
    %cst_12 = arith.constant 0.000000e+00 : f32
    %35 = vector.broadcast %25 : f32 to vector<8x128xf32>
    %36 = vector.broadcast %cst_12 : f32 to vector<8x128xf32>
    %37 = arith.select %34, %35, %36 : vector<8x128xi1>, vector<8x128xf32>
    %38 = arith.addf %32, %37 : vector<8x128xf32>
    %39 = arith.addf %27, %38 : vector<8x128xf32>
    %c0_13 = arith.constant 0 : index
    %c0_14 = arith.constant 0 : index
    %c0_15 = arith.constant 0 : index
    %40 = vector.load %arg3[%c0_13, %c0_14, %c0_15] : memref<1x8x128xf32, #tpu.memory_space<vmem>>, vector<1x8x128xf32>
    %41 = vector.shape_cast %40 : vector<1x8x128xf32> to vector<8x128xf32>
    %42 = vector.shape_cast %39 : vector<8x128xf32> to vector<1x8x128xf32>
    tpu.vector_store %arg3[%c0_13, %c0_14, %c0_15], %42 {strides = array<i32>} : memref<1x8x128xf32, #tpu.memory_space<vmem>>, vector<1x8x128xf32>,
    %c1_i32_16 = arith.constant 1 : i32
    return
  }
  func.func @transform_0(%arg0: i32) -> (i32, i32) {
    %c0_i32 = arith.constant 0 : i32
    %c0_i32_0 = arith.constant 0 : i32
    %c0_i32_1 = arith.constant 0 : i32
    return %c0_i32, %c0_i32_0 : i32, i32
  }
  func.func @transform_1(%arg0: i32) -> (i32, i32) {
    %c0_i32 = arith.constant 0 : i32
    %c0_i32_0 = arith.constant 0 : i32
    return %arg0, %c0_i32 : i32, i32
  }
  func.func @transform_2(%arg0: i32) -> (i32, i32, i32) {
    %c0_i32 = arith.constant 0 : i32
    %c0_i32_0 = arith.constant 0 : i32
    %c0_i32_1 = arith.constant 0 : i32
    return %arg0, %c0_i32, %c0_i32_0 : i32, i32, i32
  }
}

</mosaic_0001>

<llo_original>
// kernel: tpu_custom_call.1
$region0: #{tpu_custom_call.1}
  #allocation0 [shape = 'u32[]', space=smem, size = 0x4, offset = 0x4, fixed_abs, tag = 'smem constant byte address 0x4 - core index']
  #allocation1 [shape = 'u32[72,128]{1,0:T(1,128)}', space=vmem, size = 0x9000, scoped, tag = 'internal scratch']
  %s0 = inlined_call_operand.hbm [shape: f32[1,256], index: 0, kind: input, shape index: {}]
  %s1 = inlined_call_operand.hbm [shape: f32[8,256], index: 1, kind: input, shape index: {}]
  %s2 = inlined_call_operand.hbm [shape: f32[1,8,128], index: 2, kind: output, shape index: {}]
  %s3 = sld [smem:[#allocation0]]
  $region26: #{tpu_custom_call.1} parent=0
    _
  %s5 = ssub.s32 1, %s3
  %s6 = scalar_select 0, %s5, %s3
  $region1: #{tpu_custom_call.1} parent=0
    #allocation2 [shape = 'u8[1024]{0}', space=vmem, size = 0x400, scoped, tag = 'input window, operand 0, single buffered']
    #allocation3 [shape = 's32[1]{0}', space=sflag, size = 0x4, scoped, tag = 'scoped memory for tpu_custom_call.1']
    #allocation4 [shape = 's32[1]{0}', space=sflag, size = 0x4, scoped, tag = 'scoped memory for tpu_custom_call.1']
    #allocation5 [shape = 'u8[8192]{0}', space=vmem, size = 0x2000, scoped, tag = 'input window, operand 1, single buffered']
    #allocation6 [shape = 's32[1]{0}', space=sflag, size = 0x4, scoped, tag = 'scoped memory for tpu_custom_call.1']
    #allocation7 [shape = 'u8[4096]{0}', space=vmem, size = 0x1000, scoped, tag = 'output window, operand 0, single buffered']
    %7 = vsyncpa [#allocation3], 0
    %8 = vsyncpa [#allocation6], 0
    %9 = vsyncpa [#allocation4], 0
    // Predicated region
    $region2: #{tpu_custom_call.1} parent=1 // pred_check
      _
    $region3: #{tpu_custom_call.1} parent=1 // pred_check_branch
      %11 = sbr.rel (0) target = $region5
    $region4: #{tpu_custom_call.1} parent=1 // pred_region
      %13 = vsyncadd [#allocation3], 0
      %s15 = sshll.u32 %s0, 4
      %s16 = int_to_ptr.hbm [resolvable:$true] %s15
      %s17 = sshll.u32 [#allocation2], 4
      %s18 = int_to_ptr.vmem [resolvable:$true] %s17
      %20 = dma.hbm_to_vmem [thread:$0]  %s16, 32, %s18, [#allocation3]
    $region5: #{tpu_custom_call.1} parent=1 // pred_fallthru
      _
    // Predicated region
    $region6: #{tpu_custom_call.1} parent=1 // pred_check
      _
    $region7: #{tpu_custom_call.1} parent=1 // pred_check_branch
      %22 = sbr.rel (0) target = $region9
    $region8: #{tpu_custom_call.1} parent=1 // pred_region
      %24 = vsyncadd [#allocation6], 0
      %s26 = sshll.u32 %s1, 4
      %s27 = int_to_ptr.hbm [resolvable:$true] %s26
      %s28 = sshll.u32 [#allocation5], 4
      %s29 = int_to_ptr.vmem [resolvable:$true] %s28
      %31 = dma.hbm_to_vmem [thread:$0]  %s27, 256, %s29, [#allocation6]
    $region9: #{tpu_custom_call.1} parent=1 // pred_fallthru
      _
    // Predicated region
    $region10: #{tpu_custom_call.1} parent=1 // pred_check
      _
    $region11: #{tpu_custom_call.1} parent=1 // pred_check_branch
      %33 = sbr.rel (0) target = $region13
    $region12: #{tpu_custom_call.1} parent=1 // pred_region
      %35 = dma.done [#allocation3], 32
    $region13: #{tpu_custom_call.1} parent=1 // pred_fallthru
      _
    // Predicated region
    $region14: #{tpu_custom_call.1} parent=1 // pred_check
      _
    $region15: #{tpu_custom_call.1} parent=1 // pred_check_branch
      %37 = sbr.rel (0) target = $region17
    $region16: #{tpu_custom_call.1} parent=1 // pred_region
      %39 = dma.done [#allocation6], 256
    $region17: #{tpu_custom_call.1} parent=1 // pred_fallthru
      _
    %40 = vst [vmem:[#allocation7] sm:$0xff] 0.0
    %v41 = vlaneseq
    %v42 = vand.u32 %v41, 127
    %v43 = vld [vmem:[#allocation2] sm:$0x3]
    %s44 = smul.u32 0, 2
    %s45 = smul.addr %s44, 8
    %s46 = scalar_lea.vmem [#allocation5], %s45
    %v47 = vld [vmem:[%s46] sm:$0xff]
    %v48 = vld [vmem:[%s46 + $0x8] sm:$0xff]
    %51 = vrot.lane.b32.xlu0 %v47, 16
    %v52 = vpop.permute.xlu0 %51
    %53 = vrot.lane.b32.xlu0 %v48, 16
    %v54 = vpop.permute.xlu0 %53
    %vm55 = vcmask 130048
    %v56 = vsel %vm55, %v52, %v54
    %v59 = vsub.f32 %v47, %v52
    %v60 = vsub.f32 %v48, %v56
    %61 = vrot.lane.b32.xlu0 %v47, 1
    %v62 = vpop.permute.xlu0 %61
    %63 = vrot.lane.b32.xlu0 %v48, 1
    %v64 = vpop.permute.xlu0 %63
    %vm65 = vcmask 7168
    %v66 = vsel %vm65, %v62, %v64
    %v69 = vsub.f32 %v47, %v62
    %v70 = vsub.f32 %v48, %v66
    %v72 = vperm.slane %v43, 0
    %v73 = vperm.slane %v43, 1
    %74 = vrot.lane.b32.xlu0 %v72, 1
    %v75 = vpop.permute.xlu0 %74
    %76 = vrot.lane.b32.xlu0 %v73, 1
    %v77 = vpop.permute.xlu0 %76
    %v78 = vsel %vm65, %v75, %v77
    %v81 = vmul.f32 %v69, %v75
    %v82 = vmul.f32 %v70, %v78
    %v83 = vmul.f32 %v59, %v59
    %v84 = vmul.f32 %v60, %v60
    %87 = vrot.lane.b32.xlu0 %v83, 112
    %v88 = vpop.permute.xlu0 %87
    %89 = vrot.lane.b32.xlu0 %v84, 112
    %v90 = vpop.permute.xlu0 %89
    %vm91 = vcmask 916480
    %v92 = vsel %vm91, %v88, %v90
    %v95 = vsel %vm91, %v90, 0.0
    %v96 = vadd.f32 %v92, %v95
    %97 = vadd.xlane.f32.xlu0 %v96
    %v98 = vpop.xlane.xlu0 %97
    %v99 = vrot.slane %v98, 4
    %v100 = vadd.f32 %v98, %v99
    %v101 = vrot.slane %v100, 2
    %v102 = vadd.f32 %v100, %v101
    %v103 = vrot.slane %v102, 1
    %v104 = vadd.f32 %v102, %v103
    %s105 = vtos %v104
    %v106 = vmul.f32 %v81, %v81
    %v107 = vmul.f32 %v82, %v82
    %110 = vrot.lane.b32.xlu0 %v106, 127
    %v111 = vpop.permute.xlu0 %110
    %112 = vrot.lane.b32.xlu0 %v107, 127
    %v113 = vpop.permute.xlu0 %112
    %vm114 = vcmask 1039360
    %v115 = vsel %vm114, %v111, %v113
    %v118 = vsel %vm114, %v113, 0.0
    %v119 = vadd.f32 %v115, %v118
    %120 = vadd.xlane.f32.xlu0 %v119
    %v121 = vpop.xlane.xlu0 %120
    %v122 = vrot.slane %v121, 4
    %v123 = vadd.f32 %v121, %v122
    %v124 = vrot.slane %v123, 2
    %v125 = vadd.f32 %v123, %v124
    %v126 = vrot.slane %v125, 1
    %v127 = vadd.f32 %v125, %v126
    %s128 = vtos %v127
    %v129 = vld [vmem:[#allocation7] sm:$0xff]
    %vm130 = vcmp.eq.s32.totalorder %v42, 0
    %v131 = vstv %s105
    %v132 = vsel %vm130, %v131, 0.0
    %vm133 = vcmp.eq.s32.totalorder %v42, 1
    %v134 = vstv %s128
    %v135 = vsel %vm133, %v134, 0.0
    %v136 = vadd.f32 %v132, %v135
    %v137 = vadd.f32 %v129, %v136
    %138 = vst [vmem:[#allocation7] sm:$0xff] %v137
    // Predicated region
    $region18: #{tpu_custom_call.1} parent=1 // pred_check
      _
    $region19: #{tpu_custom_call.1} parent=1 // pred_check_branch
      %140 = sbr.rel (0) target = $region21
    $region20: #{tpu_custom_call.1} parent=1 // pred_region
      %142 = vsyncadd [#allocation4], 0
      %s144 = sshll.u32 [#allocation7], 4
      %s145 = int_to_ptr.vmem [resolvable:$true] %s144
      %s146 = sshll.u32 %s2, 4
      %s147 = int_to_ptr.hbm [resolvable:$true] %s146
      %149 = dma.vmem_to_hbm [thread:$0]  %s145, 128, %s147, [#allocation4]
    $region21: #{tpu_custom_call.1} parent=1 // pred_fallthru
      _
    // Predicated region
    $region22: #{tpu_custom_call.1} parent=1 // pred_check
      _
    $region23: #{tpu_custom_call.1} parent=1 // pred_check_branch
      %151 = sbr.rel (0) target = $region25
    $region24: #{tpu_custom_call.1} parent=1 // pred_region
      %153 = dma.done [#allocation4], 128
    $region25: #{tpu_custom_call.1} parent=1 // pred_fallthru
      _
    %154 = vsyncpa [#allocation3], 1
    %155 = vsyncpa [#allocation6], 1
    %156 = vsyncpa [#allocation4], 1

</llo_original>
